<compile_context>
chip_gen: v7x
topology: tpu7x:2x2x1
jax: 0.10.0
libtpu: 0.0.40
codegen_flags: <defaults>
</compile_context>

<pallas_src>
import functools

import jax
import jax.numpy as jnp
from jax.experimental import pallas as pl
from jax.experimental.pallas import tpu as pltpu


def _policy_net_kernel(x_ref, w1_ref, b1_ref, w2_ref, b2_ref, o_ref):
    # Layer 1: MXU matmul (operands may be bf16); accumulation always f32.
    h = jnp.dot(x_ref[...], w1_ref[...], preferred_element_type=jnp.float32)
    # Bias add + ReLU stay f32 on the VPU (v5e has no bf16 VPU/EUP).
    h = jnp.maximum(h + b1_ref[...], 0.0)              # (B, H) + (1, H)
    # Layer 2: cast activations to the weight dtype for the MXU operands
    # only; accumulate in f32 again.  (No-op cast when weights are f32.)
    out = jnp.dot(h.astype(w2_ref.dtype), w2_ref[...],
                  preferred_element_type=jnp.float32)
    # Ap (= padded action dim) is a multiple of 128 -> unmasked lane-dense store.
    o_ref[...] = (out + b2_ref[...]).astype(o_ref.dtype)


def _round_up(v, m):
    return ((v + m - 1) // m) * m


def _cost_estimate(B, S, H, Ap, mm_itemsize):
    flops = 2 * B * (S * H + H * Ap)
    bytes_accessed = (B * S * mm_itemsize       # x
                      + S * H * mm_itemsize     # W1
                      + H * 4                   # b1 (f32)
                      + H * Ap * mm_itemsize    # W2 (padded)
                      + Ap * 4                  # b2 (f32)
                      + B * Ap * 4)             # out (f32)
    return pl.CostEstimate(flops=flops, transcendentals=0,
                           bytes_accessed=bytes_accessed)


def _policy_net_small(x, w1, b1, w2, b2):
    """Whole problem in VMEM: no grid, no pipelining, minimum launch overhead."""
    B, S = x.shape
    H, Ap = w2.shape
    vmem = pl.BlockSpec(memory_space=pltpu.MemorySpace.VMEM)
    return pl.pallas_call(
        _policy_net_kernel,
        out_shape=jax.ShapeDtypeStruct((B, Ap), jnp.float32),
        in_specs=[vmem, vmem, vmem, vmem, vmem],
        out_specs=vmem,
        cost_estimate=_cost_estimate(B, S, H, Ap, x.dtype.itemsize),
    )(x, w1, b1, w2, b2)


def _policy_net_tiled(x, w1, b1, w2, b2, *, tb):
    """Batch-tiled path for large B: weights stay VMEM-resident across steps."""
    B, S = x.shape
    H, Ap = w2.shape
    grid = (pl.cdiv(B, tb),)
    return pl.pallas_call(
        _policy_net_kernel,
        out_shape=jax.ShapeDtypeStruct((B, Ap), jnp.float32),
        grid=grid,
        in_specs=[
            pl.BlockSpec((tb, S), lambda i: (i, 0)),   # x: tile batch axis only
            pl.BlockSpec((S, H), lambda i: (0, 0)),    # W1: constant -> resident
            pl.BlockSpec((1, H), lambda i: (0, 0)),    # b1: constant -> resident
            pl.BlockSpec((H, Ap), lambda i: (0, 0)),   # W2: constant -> resident
            pl.BlockSpec((1, Ap), lambda i: (0, 0)),   # b2: constant -> resident
        ],
        out_specs=pl.BlockSpec((tb, Ap), lambda i: (i, 0)),
        compiler_params=pltpu.CompilerParams(
            # Batch tiles are independent -> shard across v7x's 2 TensorCores.
            dimension_semantics=("parallel",),
        ),
        cost_estimate=_cost_estimate(B, S, H, Ap, x.dtype.itemsize),
    )(x, w1, b1, w2, b2)


@functools.partial(jax.jit, static_argnames=("batch_tile", "matmul_dtype"))
def policy_net_forward(x, w1, b1, w2, b2, *, batch_tile=2048,
                       matmul_dtype=jnp.bfloat16):
    """x: (B, state_dim) -> logits (B, action_dim), float32.

    w1: (state_dim, hidden_dim), b1: (1, hidden_dim)
    w2: (hidden_dim, action_dim), b2: (1, action_dim)
    """
    B, S = x.shape
    H = w1.shape[1]
    A = w2.shape[1]

    # Lane-dense output: pad the narrow action axis (9) up to a multiple of
    # 128 so the kernel's final store is a full-lane vst (no vst.msk).
    Ap = _round_up(A, 128)
    if Ap != A:
        w2 = jnp.pad(w2, ((0, 0), (0, Ap - A)))
        b2 = jnp.pad(b2, ((0, 0), (0, Ap - A)))

    # Mixed precision: only the MXU operands are cast; accumulation and all
    # VPU work (bias add, ReLU) stay f32.  matmul_dtype=jnp.float32 -> exact.
    if matmul_dtype is not None:
        x = x.astype(matmul_dtype)
        w1 = w1.astype(matmul_dtype)
        w2 = w2.astype(matmul_dtype)
    b1 = b1.astype(jnp.float32)
    b2 = b2.astype(jnp.float32)

    if B <= batch_tile:
        out = _policy_net_small(x, w1, b1, w2, b2)
    else:
        # B > batch_tile -> at least 2 grid steps by construction; balance the
        # tile so v7x's two TensorCores get (nearly) equal batch shares.
        n_steps = -(-B // batch_tile)                     # ceil div
        tb = min(batch_tile, _round_up(-(-B // n_steps), 8))
        out = _policy_net_tiled(x, w1, b1, w2, b2, tb=tb)

    return out[:, :A]


def init_policy_net_params(key, state_dim, hidden_dim, action_dim):
    """Deterministic init mimicking PyTorch nn.Linear default U[-1/sqrt(fan_in), +]."""
    k1, k2, k3, k4 = jax.random.split(key, 4)
    lim1 = 1.0 / jnp.sqrt(state_dim)
    lim2 = 1.0 / jnp.sqrt(hidden_dim)
    w1 = jax.random.uniform(k1, (state_dim, hidden_dim), jnp.float32, -lim1, lim1)
    b1 = jax.random.uniform(k2, (1, hidden_dim), jnp.float32, -lim1, lim1)
    w2 = jax.random.uniform(k3, (hidden_dim, action_dim), jnp.float32, -lim2, lim2)
    b2 = jax.random.uniform(k4, (1, action_dim), jnp.float32, -lim2, lim2)
    return w1, b1, w2, b2


def _reference(x, w1, b1, w2, b2):
    return jnp.maximum(x @ w1 + b1, 0.0) @ w2 + b2


if __name__ == "__main__":
    # Shapes consistent with the module: SC2 '3m'-style dims.
    state_dim = 48     # env.get_state_size() analogue (obs_instead_of_state)
    hidden_dim = 128   # matches the module's hidden_dim
    action_dim = 9     # env.get_total_actions() analogue ('3m' has 9 actions)

    key = jax.random.PRNGKey(0)
    kx, kp, kb = jax.random.split(key, 3)
    w1, b1, w2, b2 = init_policy_net_params(kp, state_dim, hidden_dim, action_dim)

    # 1) Small-batch path, exact f32 matmuls (tight tolerance).
    batch = 8
    x = jax.random.normal(kx, (batch, state_dim), dtype=jnp.float32)
    ref = _reference(x, w1, b1, w2, b2)
    out = jax.block_until_ready(
        policy_net_forward(x, w1, b1, w2, b2, matmul_dtype=jnp.float32))
    assert out.shape == (batch, action_dim)
    assert jnp.allclose(out, ref, atol=1e-5, rtol=1e-5)

    # 2) Small-batch path, default bf16 matmul operands (f32 accumulation).
    out_bf = jax.block_until_ready(policy_net_forward(x, w1, b1, w2, b2))
    assert out_bf.shape == (batch, action_dim)
    assert jnp.allclose(out_bf, ref, atol=5e-2, rtol=5e-2)

    # 3) Batch-tiled path (>= 2 parallel grid steps, lane-dense padded output).
    big_batch = 2048
    xb = jax.random.normal(kb, (big_batch, state_dim), dtype=jnp.float32)
    ref_b = _reference(xb, w1, b1, w2, b2)
    out_b = jax.block_until_ready(
        policy_net_forward(xb, w1, b1, w2, b2, batch_tile=1024,
                           matmul_dtype=jnp.float32))
    assert out_b.shape == (big_batch, action_dim)
    assert jnp.allclose(out_b, ref_b, atol=1e-4, rtol=1e-4)

    # 4) Batch-tiled path with the default bf16 matmul-operand cast.
    out_b_bf = jax.block_until_ready(
        policy_net_forward(xb, w1, b1, w2, b2, batch_tile=1024))
    assert out_b_bf.shape == (big_batch, action_dim)
    assert jnp.allclose(out_b_bf, ref_b, atol=5e-2, rtol=5e-2)

    print("KERNEL_OK")
</pallas_src>

<mosaic_0001>
module attributes {stable_mosaic.version = 11 : i64} {
  func.func @_policy_net_kernel(%arg0: memref<8x48xf32, #tpu.memory_space<vmem>>, %arg1: memref<48x128xf32, #tpu.memory_space<vmem>>, %arg2: memref<1x128xf32, #tpu.memory_space<vmem>>, %arg3: memref<128x128xf32, #tpu.memory_space<vmem>>, %arg4: memref<1x128xf32, #tpu.memory_space<vmem>>, %arg5: memref<8x128xf32, #tpu.memory_space<vmem>>) attributes {dimension_semantics = [], scalar_prefetch = 0 : i64, scratch_operands = 0 : i64, tpu.core_type = #tpu.core_type<tc>} {
    %c0 = arith.constant 0 : index
    %c0_0 = arith.constant 0 : index
    %0 = vector.load %arg0[%c0, %c0_0] : memref<8x48xf32, #tpu.memory_space<vmem>>, vector<8x48xf32>
    %c0_1 = arith.constant 0 : index
    %c0_2 = arith.constant 0 : index
    %1 = vector.load %arg1[%c0_1, %c0_2] : memref<48x128xf32, #tpu.memory_space<vmem>>, vector<48x128xf32>
    %cst = arith.constant dense<0.000000e+00> : vector<8x128xf32>
    %2 = tpu.matmul %0, %1, %cst {dimension_numbers = #tpu.dot_dimension_numbers<[1], [0], [0], [1], [0, 0, 1, 1], [], []>} : vector<8x48xf32>, vector<48x128xf32>, vector<8x128xf32> -> vector<8x128xf32>
    %c0_3 = arith.constant 0 : index
    %c0_4 = arith.constant 0 : index
    %3 = vector.load %arg2[%c0_3, %c0_4] : memref<1x128xf32, #tpu.memory_space<vmem>>, vector<1x128xf32>
    %4 = vector.broadcast %3 : vector<1x128xf32> to vector<8x128xf32>
    %5 = arith.addf %2, %4 : vector<8x128xf32>
    %cst_5 = arith.constant 0.000000e+00 : f32
    %6 = vector.broadcast %cst_5 : f32 to vector<8x128xf32>
    %7 = arith.maximumf %5, %6 : vector<8x128xf32>
    %c0_6 = arith.constant 0 : index
    %c0_7 = arith.constant 0 : index
    %8 = vector.load %arg3[%c0_6, %c0_7] : memref<128x128xf32, #tpu.memory_space<vmem>>, vector<128x128xf32>
    %cst_8 = arith.constant dense<0.000000e+00> : vector<8x128xf32>
    %9 = tpu.matmul %7, %8, %cst_8 {dimension_numbers = #tpu.dot_dimension_numbers<[1], [0], [0], [1], [0, 0, 1, 1], [], []>} : vector<8x128xf32>, vector<128x128xf32>, vector<8x128xf32> -> vector<8x128xf32>
    %c0_9 = arith.constant 0 : index
    %c0_10 = arith.constant 0 : index
    %10 = vector.load %arg4[%c0_9, %c0_10] : memref<1x128xf32, #tpu.memory_space<vmem>>, vector<1x128xf32>
    %11 = vector.broadcast %10 : vector<1x128xf32> to vector<8x128xf32>
    %12 = arith.addf %9, %11 : vector<8x128xf32>
    %c0_11 = arith.constant 0 : index
    %c0_12 = arith.constant 0 : index
    %13 = vector.load %arg5[%c0_11, %c0_12] : memref<8x128xf32, #tpu.memory_space<vmem>>, vector<8x128xf32>
    tpu.vector_store %arg5[%c0_11, %c0_12], %12 {strides = array<i32>} : memref<8x128xf32, #tpu.memory_space<vmem>>, vector<8x128xf32>,
    return
  }
}

</mosaic_0001>

<llo_original>
// kernel: policy_net_forward.1
$region0: #{policy_net_forward.1}
  #allocation0 [shape = 'u32[]', space=smem, size = 0x4, offset = 0x4, fixed_abs, tag = 'smem constant byte address 0x4 - core index']
  #allocation1 [shape = 'u32[144,128]{1,0:T(1,128)}', space=vmem, size = 0x12000, scoped, tag = 'internal scratch']
  %s0 = inlined_call_operand.vmem [shape: f32[8,48], index: 0, kind: input, shape index: {}]
  %s1 = inlined_call_operand.vmem [shape: f32[48,128], index: 1, kind: input, shape index: {}]
  %s2 = inlined_call_operand.vmem [shape: f32[1,128], index: 2, kind: input, shape index: {}]
  %s3 = inlined_call_operand.vmem [shape: f32[128,128], index: 3, kind: input, shape index: {}]
  %s4 = inlined_call_operand.vmem [shape: f32[1,128], index: 4, kind: input, shape index: {}]
  %s5 = inlined_call_operand.hbm [shape: f32[8,128], index: 5, kind: output, shape index: {}]
  %s6 = sld [smem:[#allocation0]]
  $region30: #{policy_net_forward.1} parent=0
    _
  %s8 = ssub.s32 1, %s6
  %s9 = scalar_select 0, %s8, %s6
  $region1: #{policy_net_forward.1} parent=0
    #allocation2 [shape = 'u8[4096]{0}', space=vmem, size = 0x1000, scoped, tag = 'output window, operand 0, single buffered']
    #allocation3 [shape = 's32[1]{0}', space=sflag, size = 0x4, scoped, tag = 'scoped memory for policy_net_forward.1']
    %10 = vsyncpa [#allocation3], 0
    // Predicated region
    $region2: #{policy_net_forward.1} parent=1 // pred_check
      _
    $region3: #{policy_net_forward.1} parent=1 // pred_check_branch
      %12 = sbr.rel (0) target = $region5
    $region4: #{policy_net_forward.1} parent=1 // pred_region
      _
    $region5: #{policy_net_forward.1} parent=1 // pred_fallthru
      _
    // Predicated region
    $region6: #{policy_net_forward.1} parent=1 // pred_check
      _
    $region7: #{policy_net_forward.1} parent=1 // pred_check_branch
      %14 = sbr.rel (0) target = $region9
    $region8: #{policy_net_forward.1} parent=1 // pred_region
      _
    $region9: #{policy_net_forward.1} parent=1 // pred_fallthru
      _
    // Predicated region
    $region10: #{policy_net_forward.1} parent=1 // pred_check
      _
    $region11: #{policy_net_forward.1} parent=1 // pred_check_branch
      %16 = sbr.rel (0) target = $region13
    $region12: #{policy_net_forward.1} parent=1 // pred_region
      _
    $region13: #{policy_net_forward.1} parent=1 // pred_fallthru
      _
    // Predicated region
    $region14: #{policy_net_forward.1} parent=1 // pred_check
      _
    $region15: #{policy_net_forward.1} parent=1 // pred_check_branch
      %18 = sbr.rel (0) target = $region17
    $region16: #{policy_net_forward.1} parent=1 // pred_region
      _
    $region17: #{policy_net_forward.1} parent=1 // pred_fallthru
      _
    // Predicated region
    $region18: #{policy_net_forward.1} parent=1 // pred_check
      _
    $region19: #{policy_net_forward.1} parent=1 // pred_check_branch
      %20 = sbr.rel (0) target = $region21
    $region20: #{policy_net_forward.1} parent=1 // pred_region
      _
    $region21: #{policy_net_forward.1} parent=1 // pred_fallthru
      _
    %v21 = vld [vmem:[%s0] sm:$0xff]
    %v22 = vld [vmem:[%s1] sm:$0xff]
    %v23 = vld [vmem:[%s1 + $0x8] sm:$0xff]
    %v24 = vld [vmem:[%s1 + $0x10] sm:$0xff]
    %v25 = vld [vmem:[%s1 + $0x18] sm:$0xff]
    %v26 = vld [vmem:[%s1 + $0x20] sm:$0xff]
    %v27 = vld [vmem:[%s1 + $0x28] sm:$0xff]
    %v28 = vld [vmem:[%s2] sm:$0x1]
    %v30 = vlaneseq
    %v31 = vshrl.u32 %v30, 7
    %v32 = vsub.s32 0, %v31
    %v33 = vrot.slane %v28, %v32
    %vm35 = vcmask 392192
    %v37 = vsel %vm35, %v21, 0
    %39 = vmatprep.subr.mxu0 0.0
    %40 = vmatpush1.msra.mxu0 %v22
    %41 = vmatprep.subr.mxu0 0.0
    %42 = vmatpush1.msra.mxu0 %v23
    %43 = vmatprep.subr.mxu0 0.0
    %44 = vmatpush1.msra.mxu0 %v24
    %45 = vmatprep.subr.mxu0 0.0
    %46 = vmatpush1.msra.mxu0 %v25
    %47 = vmatprep.subr.mxu0 0.0
    %48 = vmatpush1.msra.mxu0 %v26
    %49 = vmatprep.subr.mxu0 0.0
    %50 = vmatpush1.msra.mxu0 %v27
    %51 = vmatprep.subr.mxu0 0.0
    %52 = vmatpush1.msra.mxu0 0.0
    %53 = vmatprep.subr.mxu0 0.0
    %54 = vmatpush1.msra.mxu0 0.0
    %55 = vmatprep.subr.mxu0 0.0
    %56 = vmatpush1.msra.mxu0 0.0
    %57 = vmatprep.subr.mxu0 0.0
    %58 = vmatpush1.msra.mxu0 0.0
    %59 = vmatprep.subr.mxu0 0.0
    %60 = vmatpush1.msra.mxu0 0.0
    %61 = vmatprep.subr.mxu0 0.0
    %62 = vmatpush1.msra.mxu0 0.0
    %63 = vmatprep.subr.mxu0 0.0
    %64 = vmatpush1.msra.mxu0 0.0
    %65 = vmatprep.subr.mxu0 0.0
    %66 = vmatpush1.msra.mxu0 0.0
    %67 = vmatprep.subr.mxu0 0.0
    %68 = vmatpush1.msra.mxu0 0.0
    %69 = vmatprep.subr.mxu0 0.0
    %70 = vmatpush1.msra.mxu0 0.0
    %71 = vmatprep.subr.mxu0 0.0
    %72 = vmatpush1.msra.mxu0 0.0
    %73 = vmatprep.subr.mxu0 0.0
    %74 = vmatpush1.msra.mxu0 0.0
    %75 = vmatprep.subr.mxu0 0.0
    %76 = vmatpush1.msra.mxu0 0.0
    %77 = vmatprep.subr.mxu0 0.0
    %78 = vmatpush1.msra.mxu0 0.0
    %79 = vmatprep.subr.mxu0 0.0
    %80 = vmatpush1.msra.mxu0 0.0
    %81 = vmatprep.subr.mxu0 0.0
    %82 = vmatpush1.msra.mxu0 0.0
    %83 = vmatprep.subr.mxu0 0.0
    %84 = vmatpush1.msra.mxu0 0.0
    %85 = vmatprep.subr.mxu0 0.0
    %86 = vmatpush1.msra.mxu0 0.0
    %87 = vmatprep.subr.mxu0 0.0
    %88 = vmatpush1.msra.mxu0 0.0
    %89 = vmatprep.subr.mxu0 0.0
    %90 = vmatpush1.msra.mxu0 0.0
    %91 = vmatprep.subr.mxu0 0.0
    %92 = vmatpush1.msra.mxu0 0.0
    %93 = vmatprep.subr.mxu0 0.0
    %94 = vmatpush1.msra.mxu0 0.0
    %95 = vmatprep.subr.mxu0 0.0
    %96 = vmatpush1.msra.mxu0 0.0
    %97 = vmatprep.subr.mxu0 0.0
    %98 = vmatpush1.msra.mxu0 0.0
    %99 = vmatprep.subr.mxu0 0.0
    %100 = vmatpush1.msra.mxu0 0.0
    %101 = vmatprep.subr.mxu0 0.0
    %102 = vmatpush1.msra.mxu0 0.0
    %103 = vmatprep.mubr.f32.mxu0 0.0
    %104 = vmatmul.mubr.f32.gmra.mrb[0].mxu0 %v37
    %v105 = vpop.f32.mrb[0].mxu0
    %v106 = vadd.f32 %v33, %v105
    %v107 = vpop.f32.mrb[0].mxu0
    %108 = vdwg.mxu0
    %v109 = vmax.f32 %v106, 0.0
    %v110 = vld [vmem:[%s3] sm:$0xff]
    %v111 = vld [vmem:[%s3 + $0x8] sm:$0xff]
    %v112 = vld [vmem:[%s3 + $0x10] sm:$0xff]
    %v113 = vld [vmem:[%s3 + $0x18] sm:$0xff]
    %v114 = vld [vmem:[%s3 + $0x20] sm:$0xff]
    %v115 = vld [vmem:[%s3 + $0x28] sm:$0xff]
    %v116 = vld [vmem:[%s3 + $0x30] sm:$0xff]
    %v117 = vld [vmem:[%s3 + $0x38] sm:$0xff]
    %v118 = vld [vmem:[%s3 + $0x40] sm:$0xff]
    %v119 = vld [vmem:[%s3 + $0x48] sm:$0xff]
    %v120 = vld [vmem:[%s3 + $0x50] sm:$0xff]
    %v121 = vld [vmem:[%s3 + $0x58] sm:$0xff]
    %v122 = vld [vmem:[%s3 + $0x60] sm:$0xff]
    %v123 = vld [vmem:[%s3 + $0x68] sm:$0xff]
    %v124 = vld [vmem:[%s3 + $0x70] sm:$0xff]
    %v125 = vld [vmem:[%s3 + $0x78] sm:$0xff]
    %v126 = vld [vmem:[%s4] sm:$0x1]
    %v128 = vlaneseq
    %v129 = vshrl.u32 %v128, 7
    %v130 = vsub.s32 0, %v129
    %v131 = vrot.slane %v126, %v130
    %133 = vmatprep.subr.mxu0 0.0
    %134 = vmatpush1.msra.mxu0 %v110
    %135 = vmatprep.subr.mxu0 0.0
    %136 = vmatpush1.msra.mxu0 %v111
    %137 = vmatprep.subr.mxu0 0.0
    %138 = vmatpush1.msra.mxu0 %v112
    %139 = vmatprep.subr.mxu0 0.0
    %140 = vmatpush1.msra.mxu0 %v113
    %141 = vmatprep.subr.mxu0 0.0
    %142 = vmatpush1.msra.mxu0 %v114
    %143 = vmatprep.subr.mxu0 0.0
    %144 = vmatpush1.msra.mxu0 %v115
    %145 = vmatprep.subr.mxu0 0.0
    %146 = vmatpush1.msra.mxu0 %v116
    %147 = vmatprep.subr.mxu0 0.0
    %148 = vmatpush1.msra.mxu0 %v117
    %149 = vmatprep.subr.mxu0 0.0
    %150 = vmatpush1.msra.mxu0 %v118
    %151 = vmatprep.subr.mxu0 0.0
    %152 = vmatpush1.msra.mxu0 %v119
    %153 = vmatprep.subr.mxu0 0.0
    %154 = vmatpush1.msra.mxu0 %v120
    %155 = vmatprep.subr.mxu0 0.0
    %156 = vmatpush1.msra.mxu0 %v121
    %157 = vmatprep.subr.mxu0 0.0
    %158 = vmatpush1.msra.mxu0 %v122
    %159 = vmatprep.subr.mxu0 0.0
    %160 = vmatpush1.msra.mxu0 %v123
    %161 = vmatprep.subr.mxu0 0.0
    %162 = vmatpush1.msra.mxu0 %v124
    %163 = vmatprep.subr.mxu0 0.0
    %164 = vmatpush1.msra.mxu0 %v125
    %165 = vmatprep.subr.mxu0 0.0
    %166 = vmatpush1.msra.mxu0 0.0
    %167 = vmatprep.subr.mxu0 0.0
    %168 = vmatpush1.msra.mxu0 0.0
    %169 = vmatprep.subr.mxu0 0.0
    %170 = vmatpush1.msra.mxu0 0.0
    %171 = vmatprep.subr.mxu0 0.0
    %172 = vmatpush1.msra.mxu0 0.0
    %173 = vmatprep.subr.mxu0 0.0
    %174 = vmatpush1.msra.mxu0 0.0
    %175 = vmatprep.subr.mxu0 0.0
    %176 = vmatpush1.msra.mxu0 0.0
    %177 = vmatprep.subr.mxu0 0.0
    %178 = vmatpush1.msra.mxu0 0.0
    %179 = vmatprep.subr.mxu0 0.0
    %180 = vmatpush1.msra.mxu0 0.0
    %181 = vmatprep.subr.mxu0 0.0
    %182 = vmatpush1.msra.mxu0 0.0
    %183 = vmatprep.subr.mxu0 0.0
    %184 = vmatpush1.msra.mxu0 0.0
    %185 = vmatprep.subr.mxu0 0.0
    %186 = vmatpush1.msra.mxu0 0.0
    %187 = vmatprep.subr.mxu0 0.0
    %188 = vmatpush1.msra.mxu0 0.0
    %189 = vmatprep.subr.mxu0 0.0
    %190 = vmatpush1.msra.mxu0 0.0
    %191 = vmatprep.subr.mxu0 0.0
    %192 = vmatpush1.msra.mxu0 0.0
    %193 = vmatprep.subr.mxu0 0.0
    %194 = vmatpush1.msra.mxu0 0.0
    %195 = vmatprep.subr.mxu0 0.0
    %196 = vmatpush1.msra.mxu0 0.0
    %197 = vmatprep.mubr.f32.mxu0 0.0
    %198 = vmatmul.mubr.f32.gmra.mrb[0].mxu0 %v109
    %v199 = vpop.f32.mrb[0].mxu0
    %v200 = vadd.f32 %v131, %v199
    %v201 = vpop.f32.mrb[0].mxu0
    %202 = vdwg.mxu0
    %203 = vst [vmem:[#allocation2] sm:$0xff] %v200
    // Predicated region
    $region22: #{policy_net_forward.1} parent=1 // pred_check
      _
    $region23: #{policy_net_forward.1} parent=1 // pred_check_branch
      %205 = sbr.rel (0) target = $region25
    $region24: #{policy_net_forward.1} parent=1 // pred_region
      %s207 = ssub.s32 128, 128
      %208 = vsyncadd [#allocation3], %s207
      %s210 = sshll.u32 [#allocation2], 4
      %s211 = int_to_ptr.vmem [resolvable:$true] %s210
      %213 = dma.vmem_to_hbm [thread:$0]  %s211, 128, %s5, [#allocation3]
    $region25: #{policy_net_forward.1} parent=1 // pred_fallthru
      _
    // Predicated region
    $region26: #{policy_net_forward.1} parent=1 // pred_check
      _
    $region27: #{policy_net_forward.1} parent=1 // pred_check_branch
      %215 = sbr.rel (0) target = $region29
    $region28: #{policy_net_forward.1} parent=1 // pred_region
      %216 = dma.done [#allocation3], 128
    $region29: #{policy_net_forward.1} parent=1 // pred_fallthru
      _
    %217 = vsyncpa [#allocation3], 1

</llo_original>
